<compile_context>
chip_gen: v7x
topology: tpu7x:2x2x1
jax: 0.10.0
libtpu: 0.0.40
codegen_flags: <defaults>
</compile_context>

<pallas_src>
import math
import functools

import jax
import jax.numpy as jnp
from jax.experimental import pallas as pl
from jax.experimental.pallas import tpu as pltpu


def _round_up(v, m):
    return (v + m - 1) // m * m


def _linear_kernel(x_ref, w_ref, b_ref, o_ref):
    """One (i, j, k) grid step of y = x @ W + b (x, W already bf16).

    x_ref : (tm, tk)  bfloat16 tile of the flattened input
    w_ref : (tk, tn)  bfloat16 tile of W^T (in_features x out_features)
    b_ref : (1,  tn)  float32  tile of the bias
    o_ref : (tm, tn)  float32 output tile (VMEM-resident across k -> accumulator)
    """
    k = pl.program_id(2)

    @pl.when(k == 0)
    def _():
        o_ref[...] = jnp.zeros_like(o_ref)

    o_ref[...] += jnp.dot(x_ref[...], w_ref[...],
                          preferred_element_type=jnp.float32)

    @pl.when(k == pl.num_programs(2) - 1)
    def _():
        o_ref[...] += b_ref[...]


@functools.partial(jax.jit, static_argnames=("tm", "tn", "tk"))
def linear_pallas(x, weight, bias, *, tm=256, tn=256, tk=512):
    """y = bf16(x) @ bf16(weight)^T + bias, matching the PyTorch module.

    x:      (..., in_features)           float32
    weight: (out_features, in_features)  float32
    bias:   (out_features,)              float32
    """
    in_features = x.shape[-1]
    out_features = weight.shape[0]
    lead_shape = x.shape[:-1]

    x2d = x.reshape(-1, in_features)          # (M, K)
    M, K = x2d.shape
    N = out_features

    # bf16 truncation of both operands once, in the wrapper (bf16cutfp fwd).
    # TODO(synk): bf16cutfp may be a raw mantissa truncation; astype is RNE.
    x_bf = x2d.astype(jnp.bfloat16)
    w_bf = weight.astype(jnp.bfloat16).T      # (K, N), lane-dense on out dim
    b2d = bias.astype(jnp.float32).reshape(1, N)

    # Clamp preferred tiles to the problem size, keep layout/MXU alignment
    # (tm mult of 16 for bf16 sublanes, tn/tk mult of 128 lanes).
    tm = min(tm, _round_up(M, 16))
    tn = min(tn, _round_up(N, 128))
    tk = min(tk, _round_up(K, 128))

    # Pad every dimension to a tile multiple (zeros are harmless for the dot).
    Mp, Kp, Np = _round_up(M, tm), _round_up(K, tk), _round_up(N, tn)
    if (Mp, Kp) != (M, K):
        x_bf = jnp.pad(x_bf, ((0, Mp - M), (0, Kp - K)))
    if (Kp, Np) != (K, N):
        w_bf = jnp.pad(w_bf, ((0, Kp - K), (0, Np - N)))
    if Np != N:
        b2d = jnp.pad(b2d, ((0, 0), (0, Np - N)))

    grid = (Mp // tm, Np // tn, Kp // tk)

    # VMEM: double-buffered bf16 input tiles + bias + f32 output tile.
    vmem_bytes = 2 * (tm * tk * 2 + tk * tn * 2 + tn * 4) + 2 * tm * tn * 4
    vmem_limit = min(max(vmem_bytes + (16 << 20), 32 << 20), 48 << 20)

    cost = pl.CostEstimate(
        flops=2 * Mp * Np * Kp,
        transcendentals=0,
        bytes_accessed=Mp * Kp * 2 + Kp * Np * 2 + Mp * Np * 4 + Np * 4,
    )

    out2d = pl.pallas_call(
        _linear_kernel,
        out_shape=jax.ShapeDtypeStruct((Mp, Np), jnp.float32),
        grid_spec=pltpu.PrefetchScalarGridSpec(
            num_scalar_prefetch=0,
            grid=grid,
            in_specs=[
                pl.BlockSpec((tm, tk), lambda i, j, k: (i, k)),   # x tile
                pl.BlockSpec((tk, tn), lambda i, j, k: (k, j)),   # W^T tile
                pl.BlockSpec((1, tn), lambda i, j, k: (0, j)),    # bias tile
            ],
            out_specs=pl.BlockSpec((tm, tn), lambda i, j, k: (i, j)),
        ),
        compiler_params=pltpu.CompilerParams(
            dimension_semantics=("parallel", "parallel", "arbitrary"),
            vmem_limit_bytes=vmem_limit,
        ),
        cost_estimate=cost,
    )(x_bf, w_bf, b2d)

    out2d = out2d[:M, :N]
    return out2d.reshape(*lead_shape, out_features)


def _reference(x, weight, bias):
    in_features = x.shape[-1]
    out_features = weight.shape[0]
    y = (
        jnp.dot(
            x.astype(jnp.bfloat16).reshape(-1, in_features),
            weight.astype(jnp.bfloat16).T,
            preferred_element_type=jnp.float32,
        )
        + bias
    )
    return y.reshape(*x.shape[:-1], out_features)


if __name__ == "__main__":
    key = jax.random.PRNGKey(0)

    # Case 1: shapes that tile evenly. input (N, *, in_features) = (2, 8, 256).
    in_features, out_features = 256, 128
    batch, seq = 2, 8
    kx, kw, kb, key = jax.random.split(key, 4)
    stdv = 1.0 / math.sqrt(in_features)
    weight = jax.random.uniform(
        kw, (out_features, in_features), jnp.float32, minval=-stdv, maxval=stdv
    )
    bias = jax.random.uniform(
        kb, (out_features,), jnp.float32, minval=-stdv, maxval=stdv
    )
    x = jax.random.normal(kx, (batch, seq, in_features), jnp.float32)

    y = linear_pallas(x, weight, bias)
    jax.block_until_ready(y)
    y_ref = _reference(x, weight, bias)
    assert y.shape == (batch, seq, out_features)
    assert jnp.allclose(y, y_ref, atol=1e-3, rtol=1e-3)

    # Case 2: non-tile-multiple features (exercises the padding path).
    in_features2, out_features2 = 200, 100
    kx2, kw2, kb2, key = jax.random.split(key, 4)
    stdv2 = 1.0 / math.sqrt(in_features2)
    weight2 = jax.random.uniform(
        kw2, (out_features2, in_features2), jnp.float32, minval=-stdv2, maxval=stdv2
    )
    bias2 = jax.random.uniform(
        kb2, (out_features2,), jnp.float32, minval=-stdv2, maxval=stdv2
    )
    x2 = jax.random.normal(kx2, (3, 5, in_features2), jnp.float32)

    y2 = linear_pallas(x2, weight2, bias2)
    jax.block_until_ready(y2)
    y2_ref = _reference(x2, weight2, bias2)
    assert y2.shape == (3, 5, out_features2)
    assert jnp.allclose(y2, y2_ref, atol=1e-3, rtol=1e-3)

    print("KERNEL_OK")
</pallas_src>

<mosaic_0001>
module attributes {stable_mosaic.version = 11 : i64} {
  func.func @_linear_kernel(%arg0: i32, %arg1: i32, %arg2: i32, %arg3: memref<16x256xbf16, #tpu.memory_space<vmem>>, %arg4: memref<256x128xbf16, #tpu.memory_space<vmem>>, %arg5: memref<1x128xf32, #tpu.memory_space<vmem>>, %arg6: memref<16x128xf32, #tpu.memory_space<vmem>>) attributes {dimension_semantics = [#tpu.dimension_semantics<parallel>, #tpu.dimension_semantics<parallel>, #tpu.dimension_semantics<arbitrary>], iteration_bounds = array<i64: 1, 1, 1>, scalar_prefetch = 0 : i64, scratch_operands = 0 : i64, tpu.core_type = #tpu.core_type<tc>, window_params = [{transform_indices = @transform_0, window_bounds = array<i64: 16, 256>}, {transform_indices = @transform_1, window_bounds = array<i64: 256, 128>}, {transform_indices = @transform_2, window_bounds = array<i64: 1, 128>}, {transform_indices = @transform_3, window_bounds = array<i64: 16, 128>}]} {
    %c0_i32 = arith.constant 0 : i32
    %0 = arith.cmpi eq, %arg2, %c0_i32 : i32
    %1 = arith.extui %0 : i1 to i32
    %c0_i32_0 = arith.constant 0 : i32
    %2 = arith.cmpi ne, %1, %c0_i32_0 : i32
    scf.if %2 {
      %cst_10 = arith.constant 0.000000e+00 : f32
      %12 = vector.broadcast %cst_10 : f32 to vector<16x128xf32>
      %c0_11 = arith.constant 0 : index
      %c0_12 = arith.constant 0 : index
      %13 = vector.load %arg6[%c0_11, %c0_12] : memref<16x128xf32, #tpu.memory_space<vmem>>, vector<16x128xf32>
      tpu.vector_store %arg6[%c0_11, %c0_12], %12 {strides = array<i32>} : memref<16x128xf32, #tpu.memory_space<vmem>>, vector<16x128xf32>,
    } else {
    }
    %c0 = arith.constant 0 : index
    %c0_1 = arith.constant 0 : index
    %3 = vector.load %arg6[%c0, %c0_1] : memref<16x128xf32, #tpu.memory_space<vmem>>, vector<16x128xf32>
    %c0_2 = arith.constant 0 : index
    %c0_3 = arith.constant 0 : index
    %4 = vector.load %arg3[%c0_2, %c0_3] : memref<16x256xbf16, #tpu.memory_space<vmem>>, vector<16x256xbf16>
    %c0_4 = arith.constant 0 : index
    %c0_5 = arith.constant 0 : index
    %5 = vector.load %arg4[%c0_4, %c0_5] : memref<256x128xbf16, #tpu.memory_space<vmem>>, vector<256x128xbf16>
    %cst = arith.constant dense<0.000000e+00> : vector<16x128xf32>
    %6 = tpu.matmul %4, %5, %cst {dimension_numbers = #tpu.dot_dimension_numbers<[1], [0], [0], [1], [0, 0, 1, 1], [], []>} : vector<16x256xbf16>, vector<256x128xbf16>, vector<16x128xf32> -> vector<16x128xf32>
    %7 = arith.addf %3, %6 : vector<16x128xf32>
    %c0_6 = arith.constant 0 : index
    %c0_7 = arith.constant 0 : index
    %8 = vector.load %arg6[%c0_6, %c0_7] : memref<16x128xf32, #tpu.memory_space<vmem>>, vector<16x128xf32>
    tpu.vector_store %arg6[%c0_6, %c0_7], %7 {strides = array<i32>} : memref<16x128xf32, #tpu.memory_space<vmem>>, vector<16x128xf32>,
    %c0_i32_8 = arith.constant 0 : i32
    %9 = arith.cmpi eq, %arg2, %c0_i32_8 : i32
    %10 = arith.extui %9 : i1 to i32
    %c0_i32_9 = arith.constant 0 : i32
    %11 = arith.cmpi ne, %10, %c0_i32_9 : i32
    scf.if %11 {
      %c0_10 = arith.constant 0 : index
      %c0_11 = arith.constant 0 : index
      %12 = vector.load %arg6[%c0_10, %c0_11] : memref<16x128xf32, #tpu.memory_space<vmem>>, vector<16x128xf32>
      %c0_12 = arith.constant 0 : index
      %c0_13 = arith.constant 0 : index
      %13 = vector.load %arg5[%c0_12, %c0_13] : memref<1x128xf32, #tpu.memory_space<vmem>>, vector<1x128xf32>
      %14 = vector.broadcast %13 : vector<1x128xf32> to vector<16x128xf32>
      %15 = arith.addf %12, %14 : vector<16x128xf32>
      %c0_14 = arith.constant 0 : index
      %c0_15 = arith.constant 0 : index
      %16 = vector.load %arg6[%c0_14, %c0_15] : memref<16x128xf32, #tpu.memory_space<vmem>>, vector<16x128xf32>
      tpu.vector_store %arg6[%c0_14, %c0_15], %15 {strides = array<i32>} : memref<16x128xf32, #tpu.memory_space<vmem>>, vector<16x128xf32>,
    } else {
    }
    return
  }
  func.func @transform_0(%arg0: i32, %arg1: i32, %arg2: i32) -> (i32, i32) {
    %c0_i32 = arith.constant 0 : i32
    return %arg0, %arg2 : i32, i32
  }
  func.func @transform_1(%arg0: i32, %arg1: i32, %arg2: i32) -> (i32, i32) {
    %c0_i32 = arith.constant 0 : i32
    return %arg2, %arg1 : i32, i32
  }
  func.func @transform_2(%arg0: i32, %arg1: i32, %arg2: i32) -> (i32, i32) {
    %c0_i32 = arith.constant 0 : i32
    %c0_i32_0 = arith.constant 0 : i32
    return %c0_i32, %arg1 : i32, i32
  }
  func.func @transform_3(%arg0: i32, %arg1: i32, %arg2: i32) -> (i32, i32) {
    %c0_i32 = arith.constant 0 : i32
    return %arg0, %arg1 : i32, i32
  }
}

</mosaic_0001>

<llo_original>
// kernel: linear_pallas.1
$region0: #{linear_pallas.1}
  #allocation0 [shape = 'u32[]', space=smem, size = 0x4, offset = 0x4, fixed_abs, tag = 'smem constant byte address 0x4 - core index']
  #allocation1 [shape = 'u32[144,128]{1,0:T(1,128)}', space=vmem, size = 0x12000, scoped, tag = 'internal scratch']
  %s0 = inlined_call_operand.vmem [shape: bf16[16,256], index: 0, kind: input, shape index: {}]
  %s1 = inlined_call_operand.vmem [shape: bf16[256,128], index: 1, kind: input, shape index: {}]
  %s2 = inlined_call_operand.vmem [shape: f32[1,128], index: 2, kind: input, shape index: {}]
  %s3 = inlined_call_operand.hbm [shape: f32[16,128], index: 3, kind: output, shape index: {}]
  %s4 = sld [smem:[#allocation0]]
  $region30: #{linear_pallas.1} parent=0
    _
  %s6 = ssub.s32 1, %s4
  %s7 = scalar_select 0, %s6, %s4
  $region1: #{linear_pallas.1} parent=0
    #allocation2 [shape = 'u8[8192]{0}', space=vmem, size = 0x2000, scoped, tag = 'output window, operand 0, single buffered']
    #allocation3 [shape = 's32[1]{0}', space=sflag, size = 0x4, scoped, tag = 'scoped memory for linear_pallas.1']
    %8 = vsyncpa [#allocation3], 0
    // Predicated region
    $region2: #{linear_pallas.1} parent=1 // pred_check
      _
    $region3: #{linear_pallas.1} parent=1 // pred_check_branch
      %10 = sbr.rel (0) target = $region5
    $region4: #{linear_pallas.1} parent=1 // pred_region
      _
    $region5: #{linear_pallas.1} parent=1 // pred_fallthru
      _
    // Predicated region
    $region6: #{linear_pallas.1} parent=1 // pred_check
      _
    $region7: #{linear_pallas.1} parent=1 // pred_check_branch
      %12 = sbr.rel (0) target = $region9
    $region8: #{linear_pallas.1} parent=1 // pred_region
      _
    $region9: #{linear_pallas.1} parent=1 // pred_fallthru
      _
    // Predicated region
    $region10: #{linear_pallas.1} parent=1 // pred_check
      _
    $region11: #{linear_pallas.1} parent=1 // pred_check_branch
      %14 = sbr.rel (0) target = $region13
    $region12: #{linear_pallas.1} parent=1 // pred_region
      _
    $region13: #{linear_pallas.1} parent=1 // pred_fallthru
      _
    %p16 = scmp.eq.s32.totalorder 0, 0
    // Predicated region
    $region14: #{linear_pallas.1} parent=1 // pred_check
      %p17 = pneg %p16
    $region15: #{linear_pallas.1} parent=1 // pred_check_branch
      %19 = sbr.rel (%p17) target = $region17
    $region16: #{linear_pallas.1} parent=1 // pred_region
      %20 = vst [vmem:[#allocation2] sm:$0xff] 0.0
      %21 = vst [vmem:[#allocation2 + $0x8] sm:$0xff] 0.0
    $region17: #{linear_pallas.1} parent=1 // pred_fallthru
      _
    %v22 = vld [vmem:[#allocation2] sm:$0xff]
    %v23 = vld [vmem:[#allocation2 + $0x8] sm:$0xff]
    %v24 = vld [vmem:[%s0] sm:$0xff]
    %v25 = vld [vmem:[%s0 + $0x8] sm:$0xff]
    %v26 = vld [vmem:[%s1] sm:$0xf]
    %v27 = vld [vmem:[%s1 + $0x4] sm:$0xf]
    %v28 = vld [vmem:[%s1 + $0x8] sm:$0xf]
    %v29 = vld [vmem:[%s1 + $0xc] sm:$0xf]
    %v30 = vld [vmem:[%s1 + $0x10] sm:$0xf]
    %v31 = vld [vmem:[%s1 + $0x14] sm:$0xf]
    %v32 = vld [vmem:[%s1 + $0x18] sm:$0xf]
    %v33 = vld [vmem:[%s1 + $0x1c] sm:$0xf]
    %v34 = vld [vmem:[%s1 + $0x20] sm:$0xf]
    %v35 = vld [vmem:[%s1 + $0x24] sm:$0xf]
    %v36 = vld [vmem:[%s1 + $0x28] sm:$0xf]
    %v37 = vld [vmem:[%s1 + $0x2c] sm:$0xf]
    %v38 = vld [vmem:[%s1 + $0x30] sm:$0xf]
    %v39 = vld [vmem:[%s1 + $0x34] sm:$0xf]
    %v40 = vld [vmem:[%s1 + $0x38] sm:$0xf]
    %v41 = vld [vmem:[%s1 + $0x3c] sm:$0xf]
    %v42 = vld [vmem:[%s1 + $0x40] sm:$0xf]
    %v43 = vld [vmem:[%s1 + $0x44] sm:$0xf]
    %v44 = vld [vmem:[%s1 + $0x48] sm:$0xf]
    %v45 = vld [vmem:[%s1 + $0x4c] sm:$0xf]
    %v46 = vld [vmem:[%s1 + $0x50] sm:$0xf]
    %v47 = vld [vmem:[%s1 + $0x54] sm:$0xf]
    %v48 = vld [vmem:[%s1 + $0x58] sm:$0xf]
    %v49 = vld [vmem:[%s1 + $0x5c] sm:$0xf]
    %v50 = vld [vmem:[%s1 + $0x60] sm:$0xf]
    %v51 = vld [vmem:[%s1 + $0x64] sm:$0xf]
    %v52 = vld [vmem:[%s1 + $0x68] sm:$0xf]
    %v53 = vld [vmem:[%s1 + $0x6c] sm:$0xf]
    %v54 = vld [vmem:[%s1 + $0x70] sm:$0xf]
    %v55 = vld [vmem:[%s1 + $0x74] sm:$0xf]
    %v56 = vld [vmem:[%s1 + $0x78] sm:$0xf]
    %v57 = vld [vmem:[%s1 + $0x7c] sm:$0xf]
    %v60 = vunpack.c.l.b16 %v24
    %v61 = vunpack.c.h.b16 %v24
    %v62 = vunpack.c.l.b16 %v25
    %v63 = vunpack.c.h.b16 %v25
    %v64 = vpack.c.b16 %v62, %v60
    %v65 = vpack.c.b16 %v63, %v61
    %v100 = vunpack.c.l.b16 %v26
    %v101 = vunpack.c.l.b16 %v27
    %v102 = vunpack.c.l.b16 %v28
    %v103 = vunpack.c.l.b16 %v29
    %v104 = vunpack.c.l.b16 %v30
    %v105 = vunpack.c.l.b16 %v31
    %v106 = vunpack.c.l.b16 %v32
    %v107 = vunpack.c.l.b16 %v33
    %v108 = vunpack.c.l.b16 %v34
    %v109 = vunpack.c.l.b16 %v35
    %v110 = vunpack.c.l.b16 %v36
    %v111 = vunpack.c.l.b16 %v37
    %v112 = vunpack.c.l.b16 %v38
    %v113 = vunpack.c.l.b16 %v39
    %v114 = vunpack.c.l.b16 %v40
    %v115 = vunpack.c.l.b16 %v41
    %v116 = vunpack.c.l.b16 %v42
    %v117 = vunpack.c.l.b16 %v43
    %v118 = vunpack.c.l.b16 %v44
    %v119 = vunpack.c.l.b16 %v45
    %v120 = vunpack.c.l.b16 %v46
    %v121 = vunpack.c.l.b16 %v47
    %v122 = vunpack.c.l.b16 %v48
    %v123 = vunpack.c.l.b16 %v49
    %v124 = vunpack.c.l.b16 %v50
    %v125 = vunpack.c.l.b16 %v51
    %v126 = vunpack.c.l.b16 %v52
    %v127 = vunpack.c.l.b16 %v53
    %v128 = vunpack.c.l.b16 %v54
    %v129 = vunpack.c.l.b16 %v55
    %v130 = vunpack.c.l.b16 %v56
    %v131 = vunpack.c.l.b16 %v57
    %v132 = vpack.c.b16 %v101, %v100
    %v133 = vpack.c.b16 %v103, %v102
    %v134 = vpack.c.b16 %v105, %v104
    %v135 = vpack.c.b16 %v107, %v106
    %v136 = vpack.c.b16 %v109, %v108
    %v137 = vpack.c.b16 %v111, %v110
    %v138 = vpack.c.b16 %v113, %v112
    %v139 = vpack.c.b16 %v115, %v114
    %v140 = vpack.c.b16 %v117, %v116
    %v141 = vpack.c.b16 %v119, %v118
    %v142 = vpack.c.b16 %v121, %v120
    %v143 = vpack.c.b16 %v123, %v122
    %v144 = vpack.c.b16 %v125, %v124
    %v145 = vpack.c.b16 %v127, %v126
    %v146 = vpack.c.b16 %v129, %v128
    %v147 = vpack.c.b16 %v131, %v130
    %164 = vmatprep.subr.bf16.mxu0 0
    %165 = vmatpush1.bf16.msra.mxu0 %v132
    %166 = vmatprep.subr.bf16.mxu0 0
    %167 = vmatpush1.bf16.msra.mxu0 %v133
    %168 = vmatprep.subr.bf16.mxu0 0
    %169 = vmatpush1.bf16.msra.mxu0 %v134
    %170 = vmatprep.subr.bf16.mxu0 0
    %171 = vmatpush1.bf16.msra.mxu0 %v135
    %172 = vmatprep.subr.bf16.mxu0 0
    %173 = vmatpush1.bf16.msra.mxu0 %v136
    %174 = vmatprep.subr.bf16.mxu0 0
    %175 = vmatpush1.bf16.msra.mxu0 %v137
    %176 = vmatprep.subr.bf16.mxu0 0
    %177 = vmatpush1.bf16.msra.mxu0 %v138
    %178 = vmatprep.subr.bf16.mxu0 0
    %179 = vmatpush1.bf16.msra.mxu0 %v139
    %180 = vmatprep.subr.bf16.mxu0 0
    %181 = vmatpush1.bf16.msra.mxu0 %v140
    %182 = vmatprep.subr.bf16.mxu0 0
    %183 = vmatpush1.bf16.msra.mxu0 %v141
    %184 = vmatprep.subr.bf16.mxu0 0
    %185 = vmatpush1.bf16.msra.mxu0 %v142
    %186 = vmatprep.subr.bf16.mxu0 0
    %187 = vmatpush1.bf16.msra.mxu0 %v143
    %188 = vmatprep.subr.bf16.mxu0 0
    %189 = vmatpush1.bf16.msra.mxu0 %v144
    %190 = vmatprep.subr.bf16.mxu0 0
    %191 = vmatpush1.bf16.msra.mxu0 %v145
    %192 = vmatprep.subr.bf16.mxu0 0
    %193 = vmatpush1.bf16.msra.mxu0 %v146
    %194 = vmatprep.subr.bf16.mxu0 0
    %195 = vmatpush1.bf16.msra.mxu0 %v147
    %196 = vmatprep.mubr.bf16.mxu0 %v65
    %197 = vmatmul.mubr.bf16.gmra.mrb[0].mxu0 %v64
    %v198 = vpop.f32.mrb[0].mxu0
    %v199 = vadd.f32 0.0, %v198
    %v200 = vpop.f32.mrb[0].mxu0
    %v201 = vpop.f32.mrb[0].mxu0
    %v202 = vadd.f32 0.0, %v201
    %v203 = vpop.f32.mrb[0].mxu0
    %204 = vdwg.mxu0
    %v205 = vadd.f32 %v22, %v199
    %v206 = vadd.f32 %v23, %v202
    %207 = vst [vmem:[#allocation2] sm:$0xff] %v205
    %208 = vst [vmem:[#allocation2 + $0x8] sm:$0xff] %v206
    // Predicated region
    $region18: #{linear_pallas.1} parent=1 // pred_check
      %p209 = pneg %p16
    $region19: #{linear_pallas.1} parent=1 // pred_check_branch
      %211 = sbr.rel (%p209) target = $region21
    $region20: #{linear_pallas.1} parent=1 // pred_region
      %v212 = vld [vmem:[#allocation2] sm:$0xff]
      %v213 = vld [vmem:[#allocation2 + $0x8] sm:$0xff]
      %v214 = vld [vmem:[%s2] sm:$0x1]
      %v216 = vlaneseq
      %v217 = vshrl.u32 %v216, 7
      %v218 = vsub.s32 0, %v217
      %v219 = vrot.slane %v214, %v218
      %v221 = vadd.f32 %v212, %v219
      %v222 = vadd.f32 %v213, %v219
      %223 = vst [vmem:[#allocation2] sm:$0xff] %v221
      %224 = vst [vmem:[#allocation2 + $0x8] sm:$0xff] %v222
    $region21: #{linear_pallas.1} parent=1 // pred_fallthru
      _
    // Predicated region
    $region22: #{linear_pallas.1} parent=1 // pred_check
      _
    $region23: #{linear_pallas.1} parent=1 // pred_check_branch
      %226 = sbr.rel (0) target = $region25
    $region24: #{linear_pallas.1} parent=1 // pred_region
      %s228 = ssub.s32 256, 256
      %229 = vsyncadd [#allocation3], %s228
      %s230 = sshll.u32 [#allocation2], 4
      %s231 = int_to_ptr.vmem [resolvable:$true] %s230
      %236 = dma.vmem_to_hbm [thread:$0]  %s231, 256, %s3, [#allocation3], 128, 128, 8
    $region25: #{linear_pallas.1} parent=1 // pred_fallthru
      _
    // Predicated region
    $region26: #{linear_pallas.1} parent=1 // pred_check
      _
    $region27: #{linear_pallas.1} parent=1 // pred_check_branch
      %238 = sbr.rel (0) target = $region29
    $region28: #{linear_pallas.1} parent=1 // pred_region
      %239 = dma.done [#allocation3], 256
    $region29: #{linear_pallas.1} parent=1 // pred_fallthru
      _
    %240 = vsyncpa [#allocation3], 1

</llo_original>
